<compile_context>
chip_gen: v7x
topology: tpu7x:2x2x1
jax: 0.10.0
libtpu: 0.0.40
codegen_flags: <defaults>
</compile_context>

<pallas_src>
import jax
import jax.numpy as jnp
from jax.experimental import pallas as pl
from jax.experimental.pallas import tpu as pltpu


def tom_actor_kernel(x_ref, xtom_ref,
                     w1_ref, b1_ref,
                     w2_ref, b2_ref,
                     wtom_ref, btom_ref,
                     wouth_ref, wouttom_ref, bout_ref,
                     probs_ref):
    # ToM branch: tanh(tom_fc(x_tom))
    h_tom = jnp.tanh(
        jnp.dot(xtom_ref[...], wtom_ref[...],
                preferred_element_type=jnp.float32) + btom_ref[...])

    # Main branch: tanh(fc1(x)), tanh(fc2(.))
    h = jnp.tanh(
        jnp.dot(x_ref[...], w1_ref[...],
                preferred_element_type=jnp.float32) + b1_ref[...])
    h = jnp.tanh(
        jnp.dot(h, w2_ref[...],
                preferred_element_type=jnp.float32) + b2_ref[...])

    # Output projection without any lane-axis concatenate:
    #   concat([h, h_tom]) @ W_out == h @ W_out[:H] + h_tom @ W_out[H:]
    logits = (jnp.dot(h, wouth_ref[...], preferred_element_type=jnp.float32)
              + jnp.dot(h_tom, wouttom_ref[...],
                        preferred_element_type=jnp.float32)
              + bout_ref[...])

    # Numerically-stable softmax over the last axis.
    m = jnp.max(logits, axis=-1, keepdims=True)
    e = jnp.exp(logits - m)
    denom = jnp.sum(e, axis=-1, keepdims=True)
    # approx=False keeps the 1e-5 tolerance vs. the reference.
    probs_ref[...] = (e * pl.reciprocal(denom, approx=False)).astype(
        probs_ref.dtype)


def tom_actor_forward(x, x_tom, params, *, tile_b=256):
    """Runs the whole ToMActor forward in one Pallas call.

    Batch is tiled with a 1-D grid (TILE_B rows per step); weights and biases
    stay VMEM-resident across all grid steps (index_map -> (0, 0)).
    """
    batch = x.shape[0]
    in_dim = x.shape[1]
    tom_in = x_tom.shape[1]
    output_size = params["b_out"].shape[-1]

    # Effective batch tile: whole batch for tiny inputs (single block, block
    # shape == full array dims so no (8,128) constraint), otherwise tile_b
    # (a multiple of 8) with zero padding.
    if batch <= tile_b:
        tb = batch
        b_pad = batch
    else:
        tb = tile_b
        b_pad = pl.cdiv(batch, tb) * tb

    if b_pad != batch:
        pad = b_pad - batch
        x = jnp.pad(x, ((0, pad), (0, 0)))
        x_tom = jnp.pad(x_tom, ((0, pad), (0, 0)))

    grid = (b_pad // tb,)

    def act_spec(feat):
        # Activation tiles walk the batch axis.
        return pl.BlockSpec((tb, feat), lambda i: (i, 0))

    def resident_spec(arr):
        # Weights/biases: same block every grid step -> stays in VMEM.
        return pl.BlockSpec(arr.shape, lambda i: (0, 0))

    operands = (
        x, x_tom,
        params["w1"], params["b1"],
        params["w2"], params["b2"],
        params["w_tom"], params["b_tom"],
        params["w_out_h"], params["w_out_tom"], params["b_out"],
    )

    in_specs = [
        act_spec(in_dim), act_spec(tom_in),
        resident_spec(params["w1"]), resident_spec(params["b1"]),
        resident_spec(params["w2"]), resident_spec(params["b2"]),
        resident_spec(params["w_tom"]), resident_spec(params["b_tom"]),
        resident_spec(params["w_out_h"]), resident_spec(params["w_out_tom"]),
        resident_spec(params["b_out"]),
    ]

    out = pl.pallas_call(
        tom_actor_kernel,
        out_shape=jax.ShapeDtypeStruct((b_pad, output_size), jnp.float32),
        grid=grid,
        in_specs=in_specs,
        out_specs=act_spec(output_size),
        compiler_params=pltpu.CompilerParams(
            dimension_semantics=("parallel",)),
    )(*operands)

    return out[:batch] if b_pad != batch else out


def orthogonal_weight(key, in_features, out_features, gain=1.0):
    """Orthogonal init matching torch.nn.init.orthogonal_ in spirit, returned
    pre-transposed as [in_features, out_features]."""
    w = jax.nn.initializers.orthogonal(scale=gain)(
        key, (out_features, in_features), jnp.float32)
    return jnp.transpose(w)


def init_tom_actor_params(key, input_size, hidden_size, output_size,
                          tom_input_size, tom_hidden_size):
    k1, k2, k3, k4 = jax.random.split(key, 4)
    # The output layer is initialized as one orthogonal matrix over the full
    # concatenated input (matching torch), then split so the kernel can avoid
    # the lane-axis concat.
    w_out_full = orthogonal_weight(k4, hidden_size + tom_hidden_size,
                                   output_size)
    params = {
        "w1": orthogonal_weight(k1, input_size, hidden_size),
        "b1": jnp.zeros((1, hidden_size), jnp.float32),
        "w2": orthogonal_weight(k2, hidden_size, hidden_size),
        "b2": jnp.zeros((1, hidden_size), jnp.float32),
        "w_tom": orthogonal_weight(k3, tom_input_size, tom_hidden_size),
        "b_tom": jnp.zeros((1, tom_hidden_size), jnp.float32),
        "w_out_h": w_out_full[:hidden_size],
        "w_out_tom": w_out_full[hidden_size:],
        "b_out": jnp.zeros((1, output_size), jnp.float32),
    }
    return params


def tom_actor_reference(x, x_tom, params):
    """Pure-JAX reference for correctness checking (full-precision matmuls)."""
    hp = jax.lax.Precision.HIGHEST
    w_out = jnp.concatenate([params["w_out_h"], params["w_out_tom"]], axis=0)
    h_tom = jnp.tanh(
        jnp.dot(x_tom, params["w_tom"], precision=hp) + params["b_tom"])
    h = jnp.tanh(jnp.dot(x, params["w1"], precision=hp) + params["b1"])
    h = jnp.tanh(jnp.dot(h, params["w2"], precision=hp) + params["b2"])
    logits = jnp.dot(jnp.concatenate([h, h_tom], axis=-1), w_out,
                     precision=hp) + params["b_out"]
    return jax.nn.softmax(logits, axis=-1)


if __name__ == "__main__":
    # Small shapes consistent with the module's forward.
    input_size = 32
    hidden_size = 32
    output_size = 8
    tom_input_size = 16
    tom_hidden_size = 16

    key = jax.random.PRNGKey(0)
    kx, kt, kp, kx2, kt2 = jax.random.split(key, 5)

    params = init_tom_actor_params(kp, input_size, hidden_size, output_size,
                                   tom_input_size, tom_hidden_size)

    # --- case 1: tiny batch (single block, block == full array dims) ---
    batch = 4
    x = jax.random.normal(kx, (batch, input_size), jnp.float32)
    x_tom = jax.random.normal(kt, (batch, tom_input_size), jnp.float32)

    probs = tom_actor_forward(x, x_tom, params)
    probs = jax.block_until_ready(probs)
    ref = tom_actor_reference(x, x_tom, params)

    assert probs.shape == (batch, output_size)
    assert jnp.allclose(jnp.sum(probs, axis=-1), 1.0, atol=1e-5)
    assert jnp.allclose(probs, ref, atol=1e-5, rtol=1e-5)

    # --- case 2: gridded batch path (tiling + zero padding exercised) ---
    batch2 = 37  # not a multiple of the tile -> exercises padding + slice
    x2 = jax.random.normal(kx2, (batch2, input_size), jnp.float32)
    x2_tom = jax.random.normal(kt2, (batch2, tom_input_size), jnp.float32)

    probs2 = tom_actor_forward(x2, x2_tom, params, tile_b=16)
    probs2 = jax.block_until_ready(probs2)
    ref2 = tom_actor_reference(x2, x2_tom, params)

    assert probs2.shape == (batch2, output_size)
    assert jnp.allclose(jnp.sum(probs2, axis=-1), 1.0, atol=1e-5)
    assert jnp.allclose(probs2, ref2, atol=1e-5, rtol=1e-5)

    print("KERNEL_OK")
</pallas_src>

<mosaic_0001>
module attributes {stable_mosaic.version = 11 : i64} {
  func.func @tom_actor_kernel(%arg0: i32, %arg1: memref<4x32xf32, #tpu.memory_space<vmem>>, %arg2: memref<4x16xf32, #tpu.memory_space<vmem>>, %arg3: memref<32x32xf32, #tpu.memory_space<vmem>>, %arg4: memref<1x32xf32, #tpu.memory_space<vmem>>, %arg5: memref<32x32xf32, #tpu.memory_space<vmem>>, %arg6: memref<1x32xf32, #tpu.memory_space<vmem>>, %arg7: memref<16x16xf32, #tpu.memory_space<vmem>>, %arg8: memref<1x16xf32, #tpu.memory_space<vmem>>, %arg9: memref<32x8xf32, #tpu.memory_space<vmem>>, %arg10: memref<16x8xf32, #tpu.memory_space<vmem>>, %arg11: memref<1x8xf32, #tpu.memory_space<vmem>>, %arg12: memref<4x8xf32, #tpu.memory_space<vmem>>) attributes {dimension_semantics = [#tpu.dimension_semantics<parallel>], iteration_bounds = array<i64: 1>, scalar_prefetch = 0 : i64, scratch_operands = 0 : i64, tpu.core_type = #tpu.core_type<tc>, window_params = [{transform_indices = @transform_0, window_bounds = array<i64: 4, 32>}, {transform_indices = @transform_1, window_bounds = array<i64: 4, 16>}, {pipeline_mode = #tpu.pipeline_mode<synchronous>, transform_indices = @transform_2, window_bounds = array<i64: 32, 32>}, {pipeline_mode = #tpu.pipeline_mode<synchronous>, transform_indices = @transform_3, window_bounds = array<i64: 1, 32>}, {pipeline_mode = #tpu.pipeline_mode<synchronous>, transform_indices = @transform_4, window_bounds = array<i64: 32, 32>}, {pipeline_mode = #tpu.pipeline_mode<synchronous>, transform_indices = @transform_5, window_bounds = array<i64: 1, 32>}, {pipeline_mode = #tpu.pipeline_mode<synchronous>, transform_indices = @transform_6, window_bounds = array<i64: 16, 16>}, {pipeline_mode = #tpu.pipeline_mode<synchronous>, transform_indices = @transform_7, window_bounds = array<i64: 1, 16>}, {pipeline_mode = #tpu.pipeline_mode<synchronous>, transform_indices = @transform_8, window_bounds = array<i64: 32, 8>}, {pipeline_mode = #tpu.pipeline_mode<synchronous>, transform_indices = @transform_9, window_bounds = array<i64: 16, 8>}, {pipeline_mode = #tpu.pipeline_mode<synchronous>, transform_indices = @transform_10, window_bounds = array<i64: 1, 8>}, {transform_indices = @transform_11, window_bounds = array<i64: 4, 8>}]} {
    %c0 = arith.constant 0 : index
    %c0_0 = arith.constant 0 : index
    %0 = vector.load %arg2[%c0, %c0_0] : memref<4x16xf32, #tpu.memory_space<vmem>>, vector<4x16xf32>
    %c0_1 = arith.constant 0 : index
    %c0_2 = arith.constant 0 : index
    %1 = vector.load %arg7[%c0_1, %c0_2] : memref<16x16xf32, #tpu.memory_space<vmem>>, vector<16x16xf32>
    %cst = arith.constant dense<0.000000e+00> : vector<4x16xf32>
    %2 = tpu.matmul %0, %1, %cst {dimension_numbers = #tpu.dot_dimension_numbers<[1], [0], [0], [1], [0, 0, 1, 1], [], []>} : vector<4x16xf32>, vector<16x16xf32>, vector<4x16xf32> -> vector<4x16xf32>
    %c0_3 = arith.constant 0 : index
    %c0_4 = arith.constant 0 : index
    %3 = vector.load %arg8[%c0_3, %c0_4] : memref<1x16xf32, #tpu.memory_space<vmem>>, vector<1x16xf32>
    %4 = vector.broadcast %3 : vector<1x16xf32> to vector<4x16xf32>
    %5 = arith.addf %2, %4 : vector<4x16xf32>
    %6 = math.tanh %5 : vector<4x16xf32>
    %c0_5 = arith.constant 0 : index
    %c0_6 = arith.constant 0 : index
    %7 = vector.load %arg1[%c0_5, %c0_6] : memref<4x32xf32, #tpu.memory_space<vmem>>, vector<4x32xf32>
    %c0_7 = arith.constant 0 : index
    %c0_8 = arith.constant 0 : index
    %8 = vector.load %arg3[%c0_7, %c0_8] : memref<32x32xf32, #tpu.memory_space<vmem>>, vector<32x32xf32>
    %cst_9 = arith.constant dense<0.000000e+00> : vector<4x32xf32>
    %9 = tpu.matmul %7, %8, %cst_9 {dimension_numbers = #tpu.dot_dimension_numbers<[1], [0], [0], [1], [0, 0, 1, 1], [], []>} : vector<4x32xf32>, vector<32x32xf32>, vector<4x32xf32> -> vector<4x32xf32>
    %c0_10 = arith.constant 0 : index
    %c0_11 = arith.constant 0 : index
    %10 = vector.load %arg4[%c0_10, %c0_11] : memref<1x32xf32, #tpu.memory_space<vmem>>, vector<1x32xf32>
    %11 = vector.broadcast %10 : vector<1x32xf32> to vector<4x32xf32>
    %12 = arith.addf %9, %11 : vector<4x32xf32>
    %13 = math.tanh %12 : vector<4x32xf32>
    %c0_12 = arith.constant 0 : index
    %c0_13 = arith.constant 0 : index
    %14 = vector.load %arg5[%c0_12, %c0_13] : memref<32x32xf32, #tpu.memory_space<vmem>>, vector<32x32xf32>
    %cst_14 = arith.constant dense<0.000000e+00> : vector<4x32xf32>
    %15 = tpu.matmul %13, %14, %cst_14 {dimension_numbers = #tpu.dot_dimension_numbers<[1], [0], [0], [1], [0, 0, 1, 1], [], []>} : vector<4x32xf32>, vector<32x32xf32>, vector<4x32xf32> -> vector<4x32xf32>
    %c0_15 = arith.constant 0 : index
    %c0_16 = arith.constant 0 : index
    %16 = vector.load %arg6[%c0_15, %c0_16] : memref<1x32xf32, #tpu.memory_space<vmem>>, vector<1x32xf32>
    %17 = vector.broadcast %16 : vector<1x32xf32> to vector<4x32xf32>
    %18 = arith.addf %15, %17 : vector<4x32xf32>
    %19 = math.tanh %18 : vector<4x32xf32>
    %c0_17 = arith.constant 0 : index
    %c0_18 = arith.constant 0 : index
    %20 = vector.load %arg9[%c0_17, %c0_18] : memref<32x8xf32, #tpu.memory_space<vmem>>, vector<32x8xf32>
    %cst_19 = arith.constant dense<0.000000e+00> : vector<4x8xf32>
    %21 = tpu.matmul %19, %20, %cst_19 {dimension_numbers = #tpu.dot_dimension_numbers<[1], [0], [0], [1], [0, 0, 1, 1], [], []>} : vector<4x32xf32>, vector<32x8xf32>, vector<4x8xf32> -> vector<4x8xf32>
    %c0_20 = arith.constant 0 : index
    %c0_21 = arith.constant 0 : index
    %22 = vector.load %arg10[%c0_20, %c0_21] : memref<16x8xf32, #tpu.memory_space<vmem>>, vector<16x8xf32>
    %cst_22 = arith.constant dense<0.000000e+00> : vector<4x8xf32>
    %23 = tpu.matmul %6, %22, %cst_22 {dimension_numbers = #tpu.dot_dimension_numbers<[1], [0], [0], [1], [0, 0, 1, 1], [], []>} : vector<4x16xf32>, vector<16x8xf32>, vector<4x8xf32> -> vector<4x8xf32>
    %24 = arith.addf %21, %23 : vector<4x8xf32>
    %c0_23 = arith.constant 0 : index
    %c0_24 = arith.constant 0 : index
    %25 = vector.load %arg11[%c0_23, %c0_24] : memref<1x8xf32, #tpu.memory_space<vmem>>, vector<1x8xf32>
    %26 = vector.broadcast %25 : vector<1x8xf32> to vector<4x8xf32>
    %27 = arith.addf %24, %26 : vector<4x8xf32>
    %cst_25 = arith.constant dense<0xFF800000> : vector<4xf32>
    %28 = vector.multi_reduction <maximumf>, %27, %cst_25 [1] : vector<4x8xf32> to vector<4xf32>
    %29 = vector.shape_cast %28 : vector<4xf32> to vector<4x1xf32>
    %30 = vector.broadcast %29 : vector<4x1xf32> to vector<4x8xf32>
    %31 = arith.subf %27, %30 : vector<4x8xf32>
    %32 = math.exp %31 : vector<4x8xf32>
    %cst_26 = arith.constant dense<0.000000e+00> : vector<4xf32>
    %33 = vector.multi_reduction <add>, %32, %cst_26 [1] : vector<4x8xf32> to vector<4xf32>
    %34 = vector.shape_cast %33 : vector<4xf32> to vector<4x1xf32>
    %35 = tpu.reciprocal %34 : vector<4x1xf32> -> vector<4x1xf32>
    %36 = vector.broadcast %35 : vector<4x1xf32> to vector<4x8xf32>
    %37 = arith.mulf %32, %36 : vector<4x8xf32>
    %c0_27 = arith.constant 0 : index
    %c0_28 = arith.constant 0 : index
    %38 = vector.load %arg12[%c0_27, %c0_28] : memref<4x8xf32, #tpu.memory_space<vmem>>, vector<4x8xf32>
    tpu.vector_store %arg12[%c0_27, %c0_28], %37 {strides = array<i32>} : memref<4x8xf32, #tpu.memory_space<vmem>>, vector<4x8xf32>,
    return
  }
  func.func @transform_0(%arg0: i32) -> (i32, i32) {
    %c0_i32 = arith.constant 0 : i32
    %c0_i32_0 = arith.constant 0 : i32
    return %arg0, %c0_i32 : i32, i32
  }
  func.func @transform_1(%arg0: i32) -> (i32, i32) {
    %c0_i32 = arith.constant 0 : i32
    %c0_i32_0 = arith.constant 0 : i32
    return %arg0, %c0_i32 : i32, i32
  }
  func.func @transform_2(%arg0: i32) -> (i32, i32) {
    %c0_i32 = arith.constant 0 : i32
    %c0_i32_0 = arith.constant 0 : i32
    %c0_i32_1 = arith.constant 0 : i32
    return %c0_i32, %c0_i32_0 : i32, i32
  }
  func.func @transform_3(%arg0: i32) -> (i32, i32) {
    %c0_i32 = arith.constant 0 : i32
    %c0_i32_0 = arith.constant 0 : i32
    %c0_i32_1 = arith.constant 0 : i32
    return %c0_i32, %c0_i32_0 : i32, i32
  }
  func.func @transform_4(%arg0: i32) -> (i32, i32) {
    %c0_i32 = arith.constant 0 : i32
    %c0_i32_0 = arith.constant 0 : i32
    %c0_i32_1 = arith.constant 0 : i32
    return %c0_i32, %c0_i32_0 : i32, i32
  }
  func.func @transform_5(%arg0: i32) -> (i32, i32) {
    %c0_i32 = arith.constant 0 : i32
    %c0_i32_0 = arith.constant 0 : i32
    %c0_i32_1 = arith.constant 0 : i32
    return %c0_i32, %c0_i32_0 : i32, i32
  }
  func.func @transform_6(%arg0: i32) -> (i32, i32) {
    %c0_i32 = arith.constant 0 : i32
    %c0_i32_0 = arith.constant 0 : i32
    %c0_i32_1 = arith.constant 0 : i32
    return %c0_i32, %c0_i32_0 : i32, i32
  }
  func.func @transform_7(%arg0: i32) -> (i32, i32) {
    %c0_i32 = arith.constant 0 : i32
    %c0_i32_0 = arith.constant 0 : i32
    %c0_i32_1 = arith.constant 0 : i32
    return %c0_i32, %c0_i32_0 : i32, i32
  }
  func.func @transform_8(%arg0: i32) -> (i32, i32) {
    %c0_i32 = arith.constant 0 : i32
    %c0_i32_0 = arith.constant 0 : i32
    %c0_i32_1 = arith.constant 0 : i32
    return %c0_i32, %c0_i32_0 : i32, i32
  }
  func.func @transform_9(%arg0: i32) -> (i32, i32) {
    %c0_i32 = arith.constant 0 : i32
    %c0_i32_0 = arith.constant 0 : i32
    %c0_i32_1 = arith.constant 0 : i32
    return %c0_i32, %c0_i32_0 : i32, i32
  }
  func.func @transform_10(%arg0: i32) -> (i32, i32) {
    %c0_i32 = arith.constant 0 : i32
    %c0_i32_0 = arith.constant 0 : i32
    %c0_i32_1 = arith.constant 0 : i32
    return %c0_i32, %c0_i32_0 : i32, i32
  }
  func.func @transform_11(%arg0: i32) -> (i32, i32) {
    %c0_i32 = arith.constant 0 : i32
    %c0_i32_0 = arith.constant 0 : i32
    return %arg0, %c0_i32 : i32, i32
  }
}

</mosaic_0001>

<llo_original>
// kernel: tpu_custom_call.1
$region0: #{tpu_custom_call.1}
  #allocation0 [shape = 'u32[]', space=smem, size = 0x4, offset = 0x4, fixed_abs, tag = 'smem constant byte address 0x4 - core index']
  #allocation1 [shape = 'u32[144,128]{1,0:T(1,128)}', space=vmem, size = 0x12000, scoped, tag = 'internal scratch']
  %s0 = inlined_call_operand.hbm [shape: f32[4,32], index: 0, kind: input, shape index: {}]
  %s1 = inlined_call_operand.hbm [shape: f32[4,16], index: 1, kind: input, shape index: {}]
  %s2 = inlined_call_operand.vmem [shape: f32[32,32], index: 2, kind: input, shape index: {}]
  %s3 = inlined_call_operand.vmem [shape: f32[1,32], index: 3, kind: input, shape index: {}]
  %s4 = inlined_call_operand.vmem [shape: f32[32,32], index: 4, kind: input, shape index: {}]
  %s5 = inlined_call_operand.vmem [shape: f32[1,32], index: 5, kind: input, shape index: {}]
  %s6 = inlined_call_operand.vmem [shape: f32[16,16], index: 6, kind: input, shape index: {}]
  %s7 = inlined_call_operand.hbm [shape: f32[1,16], index: 7, kind: input, shape index: {}]
  %s8 = inlined_call_operand.vmem [shape: f32[32,8], index: 8, kind: input, shape index: {}]
  %s9 = inlined_call_operand.vmem [shape: f32[16,8], index: 9, kind: input, shape index: {}]
  %s10 = inlined_call_operand.vmem [shape: f32[1,8], index: 10, kind: input, shape index: {}]
  %s11 = inlined_call_operand.hbm [shape: f32[4,8], index: 11, kind: output, shape index: {}]
  %s12 = sld [smem:[#allocation0]]
  $region66: #{tpu_custom_call.1} parent=0
    _
  %s14 = ssub.s32 1, %s12
  %s15 = scalar_select 0, %s14, %s12
  $region1: #{tpu_custom_call.1} parent=0
    #allocation2 [shape = 'u8[2048]{0}', space=vmem, size = 0x800, scoped, tag = 'input window, operand 0, single buffered']
    #allocation3 [shape = 's32[1]{0}', space=sflag, size = 0x4, scoped, tag = 'scoped memory for tpu_custom_call.1']
    #allocation4 [shape = 's32[1]{0}', space=sflag, size = 0x4, scoped, tag = 'scoped memory for tpu_custom_call.1']
    #allocation5 [shape = 'u8[2048]{0}', space=vmem, size = 0x800, scoped, tag = 'input window, operand 1, single buffered']
    #allocation6 [shape = 's32[1]{0}', space=sflag, size = 0x4, scoped, tag = 'scoped memory for tpu_custom_call.1']
    #allocation7 [shape = 'u8[512]{0}', space=vmem, size = 0x400, scoped, tag = 'input window, operand 7, single buffered']
    #allocation8 [shape = 'u8[2048]{0}', space=vmem, size = 0x800, scoped, tag = 'output window, operand 0, single buffered']
    %16 = vsyncpa [#allocation3], 0
    %17 = vsyncpa [#allocation6], 0
    %18 = vsyncpa [#allocation4], 0
    // Predicated region
    $region2: #{tpu_custom_call.1} parent=1 // pred_check
      _
    $region3: #{tpu_custom_call.1} parent=1 // pred_check_branch
      %20 = sbr.rel (0) target = $region5
    $region4: #{tpu_custom_call.1} parent=1 // pred_region
      %s22 = ssub.s32 64, 64
      %23 = vsyncadd [#allocation3], %s22
      %s25 = sshll.u32 [#allocation2], 4
      %s26 = int_to_ptr.vmem [resolvable:$true] %s25
      %28 = dma.hbm_to_vmem [thread:$0]  %s0, 64, %s26, [#allocation3]
    $region5: #{tpu_custom_call.1} parent=1 // pred_fallthru
      _
    // Predicated region
    $region6: #{tpu_custom_call.1} parent=1 // pred_check
      _
    $region7: #{tpu_custom_call.1} parent=1 // pred_check_branch
      %30 = sbr.rel (0) target = $region9
    $region8: #{tpu_custom_call.1} parent=1 // pred_region
      %s32 = ssub.s32 64, 64
      %33 = vsyncadd [#allocation6], %s32
      %s35 = sshll.u32 [#allocation5], 4
      %s36 = int_to_ptr.vmem [resolvable:$true] %s35
      %38 = dma.hbm_to_vmem [thread:$0]  %s1, 64, %s36, [#allocation6]
    $region9: #{tpu_custom_call.1} parent=1 // pred_fallthru
      _
    // Predicated region
    $region10: #{tpu_custom_call.1} parent=1 // pred_check
      _
    $region11: #{tpu_custom_call.1} parent=1 // pred_check_branch
      %40 = sbr.rel (0) target = $region13
    $region12: #{tpu_custom_call.1} parent=1 // pred_region
      _
    $region13: #{tpu_custom_call.1} parent=1 // pred_fallthru
      _
    // Predicated region
    $region14: #{tpu_custom_call.1} parent=1 // pred_check
      _
    $region15: #{tpu_custom_call.1} parent=1 // pred_check_branch
      %42 = sbr.rel (0) target = $region17
    $region16: #{tpu_custom_call.1} parent=1 // pred_region
      _
    $region17: #{tpu_custom_call.1} parent=1 // pred_fallthru
      _
    // Predicated region
    $region18: #{tpu_custom_call.1} parent=1 // pred_check
      _
    $region19: #{tpu_custom_call.1} parent=1 // pred_check_branch
      %44 = sbr.rel (0) target = $region21
    $region20: #{tpu_custom_call.1} parent=1 // pred_region
      _
    $region21: #{tpu_custom_call.1} parent=1 // pred_fallthru
      _
    // Predicated region
    $region22: #{tpu_custom_call.1} parent=1 // pred_check
      _
    $region23: #{tpu_custom_call.1} parent=1 // pred_check_branch
      %46 = sbr.rel (0) target = $region25
    $region24: #{tpu_custom_call.1} parent=1 // pred_region
      _
    $region25: #{tpu_custom_call.1} parent=1 // pred_fallthru
      _
    // Predicated region
    $region26: #{tpu_custom_call.1} parent=1 // pred_check
      _
    $region27: #{tpu_custom_call.1} parent=1 // pred_check_branch
      %48 = sbr.rel (0) target = $region29
    $region28: #{tpu_custom_call.1} parent=1 // pred_region
      _
    $region29: #{tpu_custom_call.1} parent=1 // pred_fallthru
      _
    // Predicated region
    $region30: #{tpu_custom_call.1} parent=1 // pred_check
      _
    $region31: #{tpu_custom_call.1} parent=1 // pred_check_branch
      %50 = sbr.rel (0) target = $region33
    $region32: #{tpu_custom_call.1} parent=1 // pred_region
      %s52 = ssub.s32 16, 16
      %53 = vsyncadd [#allocation6], %s52
      %s55 = sshll.u32 [#allocation7], 4
      %s56 = int_to_ptr.vmem [resolvable:$true] %s55
      %58 = dma.hbm_to_vmem [thread:$0]  %s7, 16, %s56, [#allocation6]
    $region33: #{tpu_custom_call.1} parent=1 // pred_fallthru
      _
    // Predicated region
    $region34: #{tpu_custom_call.1} parent=1 // pred_check
      _
    $region35: #{tpu_custom_call.1} parent=1 // pred_check_branch
      %60 = sbr.rel (0) target = $region37
    $region36: #{tpu_custom_call.1} parent=1 // pred_region
      _
    $region37: #{tpu_custom_call.1} parent=1 // pred_fallthru
      _
    // Predicated region
    $region38: #{tpu_custom_call.1} parent=1 // pred_check
      _
    $region39: #{tpu_custom_call.1} parent=1 // pred_check_branch
      %62 = sbr.rel (0) target = $region41
    $region40: #{tpu_custom_call.1} parent=1 // pred_region
      _
    $region41: #{tpu_custom_call.1} parent=1 // pred_fallthru
      _
    // Predicated region
    $region42: #{tpu_custom_call.1} parent=1 // pred_check
      _
    $region43: #{tpu_custom_call.1} parent=1 // pred_check_branch
      %64 = sbr.rel (0) target = $region45
    $region44: #{tpu_custom_call.1} parent=1 // pred_region
      _
    $region45: #{tpu_custom_call.1} parent=1 // pred_fallthru
      _
    // Predicated region
    $region46: #{tpu_custom_call.1} parent=1 // pred_check
      _
    $region47: #{tpu_custom_call.1} parent=1 // pred_check_branch
      %66 = sbr.rel (0) target = $region49
    $region48: #{tpu_custom_call.1} parent=1 // pred_region
      %67 = dma.done [#allocation3], 64
    $region49: #{tpu_custom_call.1} parent=1 // pred_fallthru
      _
    // Predicated region
    $region50: #{tpu_custom_call.1} parent=1 // pred_check
      _
    $region51: #{tpu_custom_call.1} parent=1 // pred_check_branch
      %69 = sbr.rel (0) target = $region53
    $region52: #{tpu_custom_call.1} parent=1 // pred_region
      %70 = dma.done [#allocation6], 64
    $region53: #{tpu_custom_call.1} parent=1 // pred_fallthru
      _
    // Predicated region
    $region54: #{tpu_custom_call.1} parent=1 // pred_check
      _
    $region55: #{tpu_custom_call.1} parent=1 // pred_check_branch
      %72 = sbr.rel (0) target = $region57
    $region56: #{tpu_custom_call.1} parent=1 // pred_region
      %73 = dma.done [#allocation6], 16
    $region57: #{tpu_custom_call.1} parent=1 // pred_fallthru
      _
    %v74 = vld [vmem:[#allocation5] sm:$0xf]
    %v75 = vld [vmem:[%s6] sm:$0xff]
    %v76 = vld [vmem:[%s6 + $0x8] sm:$0xff]
    %v77 = vld [vmem:[#allocation7] sm:$0x1]
    %v79 = vlaneseq
    %v80 = vshrl.u32 %v79, 7
    %v81 = vsub.s32 0, %v80
    %v82 = vrot.slane %v77, %v81
    %vm84 = vcmask 130048
    %v86 = vsel %vm84, %v74, 0
    %88 = vmatprep.subr.mxu0 0.0
    %89 = vmatpush1.msra.mxu0 %v75
    %90 = vmatprep.subr.mxu0 0.0
    %91 = vmatpush1.msra.mxu0 %v76
    %92 = vmatprep.subr.mxu0 0.0
    %93 = vmatpush1.msra.mxu0 0.0
    %94 = vmatprep.subr.mxu0 0.0
    %95 = vmatpush1.msra.mxu0 0.0
    %96 = vmatprep.subr.mxu0 0.0
    %97 = vmatpush1.msra.mxu0 0.0
    %98 = vmatprep.subr.mxu0 0.0
    %99 = vmatpush1.msra.mxu0 0.0
    %100 = vmatprep.subr.mxu0 0.0
    %101 = vmatpush1.msra.mxu0 0.0
    %102 = vmatprep.subr.mxu0 0.0
    %103 = vmatpush1.msra.mxu0 0.0
    %104 = vmatprep.subr.mxu0 0.0
    %105 = vmatpush1.msra.mxu0 0.0
    %106 = vmatprep.subr.mxu0 0.0
    %107 = vmatpush1.msra.mxu0 0.0
    %108 = vmatprep.subr.mxu0 0.0
    %109 = vmatpush1.msra.mxu0 0.0
    %110 = vmatprep.subr.mxu0 0.0
    %111 = vmatpush1.msra.mxu0 0.0
    %112 = vmatprep.subr.mxu0 0.0
    %113 = vmatpush1.msra.mxu0 0.0
    %114 = vmatprep.subr.mxu0 0.0
    %115 = vmatpush1.msra.mxu0 0.0
    %116 = vmatprep.subr.mxu0 0.0
    %117 = vmatpush1.msra.mxu0 0.0
    %118 = vmatprep.subr.mxu0 0.0
    %119 = vmatpush1.msra.mxu0 0.0
    %120 = vmatprep.subr.mxu0 0.0
    %121 = vmatpush1.msra.mxu0 0.0
    %122 = vmatprep.subr.mxu0 0.0
    %123 = vmatpush1.msra.mxu0 0.0
    %124 = vmatprep.subr.mxu0 0.0
    %125 = vmatpush1.msra.mxu0 0.0
    %126 = vmatprep.subr.mxu0 0.0
    %127 = vmatpush1.msra.mxu0 0.0
    %128 = vmatprep.subr.mxu0 0.0
    %129 = vmatpush1.msra.mxu0 0.0
    %130 = vmatprep.subr.mxu0 0.0
    %131 = vmatpush1.msra.mxu0 0.0
    %132 = vmatprep.subr.mxu0 0.0
    %133 = vmatpush1.msra.mxu0 0.0
    %134 = vmatprep.subr.mxu0 0.0
    %135 = vmatpush1.msra.mxu0 0.0
    %136 = vmatprep.subr.mxu0 0.0
    %137 = vmatpush1.msra.mxu0 0.0
    %138 = vmatprep.subr.mxu0 0.0
    %139 = vmatpush1.msra.mxu0 0.0
    %140 = vmatprep.subr.mxu0 0.0
    %141 = vmatpush1.msra.mxu0 0.0
    %142 = vmatprep.subr.mxu0 0.0
    %143 = vmatpush1.msra.mxu0 0.0
    %144 = vmatprep.subr.mxu0 0.0
    %145 = vmatpush1.msra.mxu0 0.0
    %146 = vmatprep.subr.mxu0 0.0
    %147 = vmatpush1.msra.mxu0 0.0
    %148 = vmatprep.subr.mxu0 0.0
    %149 = vmatpush1.msra.mxu0 0.0
    %150 = vmatprep.subr.mxu0 0.0
    %151 = vmatpush1.msra.mxu0 0.0
    %152 = vmatprep.mubr.f32.mxu0 0.0
    %153 = vmatmul.mubr.f32.gmra.mrb[0].mxu0 %v86
    %v154 = vpop.f32.mrb[0].mxu0
    %v155 = vadd.f32 %v82, %v154
    %v156 = vpop.f32.mrb[0].mxu0
    %157 = vdwg.mxu0
    %v158 = vtanh.pop %v155
    %v159 = vld [vmem:[#allocation2] sm:$0xf]
    %v160 = vld [vmem:[%s2] sm:$0xff]
    %v161 = vld [vmem:[%s2 + $0x8] sm:$0xff]
    %v162 = vld [vmem:[%s2 + $0x10] sm:$0xff]
    %v163 = vld [vmem:[%s2 + $0x18] sm:$0xff]
    %v164 = vld [vmem:[%s3] sm:$0x1]
    %v166 = vlaneseq
    %v167 = vshrl.u32 %v166, 7
    %v168 = vsub.s32 0, %v167
    %v169 = vrot.slane %v164, %v168
    %vm171 = vcmask 261120
    %v173 = vsel %vm171, %v159, 0
    %175 = vmatprep.subr.mxu0 0.0
    %176 = vmatpush1.msra.mxu0 %v160
    %177 = vmatprep.subr.mxu0 0.0
    %178 = vmatpush1.msra.mxu0 %v161
    %179 = vmatprep.subr.mxu0 0.0
    %180 = vmatpush1.msra.mxu0 %v162
    %181 = vmatprep.subr.mxu0 0.0
    %182 = vmatpush1.msra.mxu0 %v163
    %183 = vmatprep.subr.mxu0 0.0
    %184 = vmatpush1.msra.mxu0 0.0
    %185 = vmatprep.subr.mxu0 0.0
    %186 = vmatpush1.msra.mxu0 0.0
    %187 = vmatprep.subr.mxu0 0.0
    %188 = vmatpush1.msra.mxu0 0.0
    %189 = vmatprep.subr.mxu0 0.0
    %190 = vmatpush1.msra.mxu0 0.0
    %191 = vmatprep.subr.mxu0 0.0
    %192 = vmatpush1.msra.mxu0 0.0
    %193 = vmatprep.subr.mxu0 0.0
    %194 = vmatpush1.msra.mxu0 0.0
    %195 = vmatprep.subr.mxu0 0.0
    %196 = vmatpush1.msra.mxu0 0.0
    %197 = vmatprep.subr.mxu0 0.0
    %198 = vmatpush1.msra.mxu0 0.0
    %199 = vmatprep.subr.mxu0 0.0
    %200 = vmatpush1.msra.mxu0 0.0
    %201 = vmatprep.subr.mxu0 0.0
    %202 = vmatpush1.msra.mxu0 0.0
    %203 = vmatprep.subr.mxu0 0.0
    %204 = vmatpush1.msra.mxu0 0.0
    %205 = vmatprep.subr.mxu0 0.0
    %206 = vmatpush1.msra.mxu0 0.0
    %207 = vmatprep.subr.mxu0 0.0
    %208 = vmatpush1.msra.mxu0 0.0
    %209 = vmatprep.subr.mxu0 0.0
    %210 = vmatpush1.msra.mxu0 0.0
    %211 = vmatprep.subr.mxu0 0.0
    %212 = vmatpush1.msra.mxu0 0.0
    %213 = vmatprep.subr.mxu0 0.0
    %214 = vmatpush1.msra.mxu0 0.0
    %215 = vmatprep.subr.mxu0 0.0
    %216 = vmatpush1.msra.mxu0 0.0
    %217 = vmatprep.subr.mxu0 0.0
    %218 = vmatpush1.msra.mxu0 0.0
    %219 = vmatprep.subr.mxu0 0.0
    %220 = vmatpush1.msra.mxu0 0.0
    %221 = vmatprep.subr.mxu0 0.0
    %222 = vmatpush1.msra.mxu0 0.0
    %223 = vmatprep.subr.mxu0 0.0
    %224 = vmatpush1.msra.mxu0 0.0
    %225 = vmatprep.subr.mxu0 0.0
    %226 = vmatpush1.msra.mxu0 0.0
    %227 = vmatprep.subr.mxu0 0.0
    %228 = vmatpush1.msra.mxu0 0.0
    %229 = vmatprep.subr.mxu0 0.0
    %230 = vmatpush1.msra.mxu0 0.0
    %231 = vmatprep.subr.mxu0 0.0
    %232 = vmatpush1.msra.mxu0 0.0
    %233 = vmatprep.subr.mxu0 0.0
    %234 = vmatpush1.msra.mxu0 0.0
    %235 = vmatprep.subr.mxu0 0.0
    %236 = vmatpush1.msra.mxu0 0.0
    %237 = vmatprep.subr.mxu0 0.0
    %238 = vmatpush1.msra.mxu0 0.0
    %239 = vmatprep.mubr.f32.mxu0 0.0
    %240 = vmatmul.mubr.f32.gmra.mrb[0].mxu0 %v173
    %v241 = vpop.f32.mrb[0].mxu0
    %v242 = vadd.f32 %v169, %v241
    %v243 = vpop.f32.mrb[0].mxu0
    %244 = vdwg.mxu0
    %v245 = vtanh.pop %v242
    %v246 = vld [vmem:[%s4] sm:$0xff]
    %v247 = vld [vmem:[%s4 + $0x8] sm:$0xff]
    %v248 = vld [vmem:[%s4 + $0x10] sm:$0xff]
    %v249 = vld [vmem:[%s4 + $0x18] sm:$0xff]
    %v250 = vld [vmem:[%s5] sm:$0x1]
    %v252 = vlaneseq
    %v253 = vshrl.u32 %v252, 7
    %v254 = vsub.s32 0, %v253
    %v255 = vrot.slane %v250, %v254
    %v258 = vsel %vm171, %v245, 0
    %260 = vmatprep.subr.mxu0 0.0
    %261 = vmatpush1.msra.mxu0 %v246
    %262 = vmatprep.subr.mxu0 0.0
    %263 = vmatpush1.msra.mxu0 %v247
    %264 = vmatprep.subr.mxu0 0.0
    %265 = vmatpush1.msra.mxu0 %v248
    %266 = vmatprep.subr.mxu0 0.0
    %267 = vmatpush1.msra.mxu0 %v249
    %268 = vmatprep.subr.mxu0 0.0
    %269 = vmatpush1.msra.mxu0 0.0
    %270 = vmatprep.subr.mxu0 0.0
    %271 = vmatpush1.msra.mxu0 0.0
    %272 = vmatprep.subr.mxu0 0.0
    %273 = vmatpush1.msra.mxu0 0.0
    %274 = vmatprep.subr.mxu0 0.0
    %275 = vmatpush1.msra.mxu0 0.0
    %276 = vmatprep.subr.mxu0 0.0
    %277 = vmatpush1.msra.mxu0 0.0
    %278 = vmatprep.subr.mxu0 0.0
    %279 = vmatpush1.msra.mxu0 0.0
    %280 = vmatprep.subr.mxu0 0.0
    %281 = vmatpush1.msra.mxu0 0.0
    %282 = vmatprep.subr.mxu0 0.0
    %283 = vmatpush1.msra.mxu0 0.0
    %284 = vmatprep.subr.mxu0 0.0
    %285 = vmatpush1.msra.mxu0 0.0
    %286 = vmatprep.subr.mxu0 0.0
    %287 = vmatpush1.msra.mxu0 0.0
    %288 = vmatprep.subr.mxu0 0.0
    %289 = vmatpush1.msra.mxu0 0.0
    %290 = vmatprep.subr.mxu0 0.0
    %291 = vmatpush1.msra.mxu0 0.0
    %292 = vmatprep.subr.mxu0 0.0
    %293 = vmatpush1.msra.mxu0 0.0
    %294 = vmatprep.subr.mxu0 0.0
    %295 = vmatpush1.msra.mxu0 0.0
    %296 = vmatprep.subr.mxu0 0.0
    %297 = vmatpush1.msra.mxu0 0.0
    %298 = vmatprep.subr.mxu0 0.0
    %299 = vmatpush1.msra.mxu0 0.0
    %300 = vmatprep.subr.mxu0 0.0
    %301 = vmatpush1.msra.mxu0 0.0
    %302 = vmatprep.subr.mxu0 0.0
    %303 = vmatpush1.msra.mxu0 0.0
    %304 = vmatprep.subr.mxu0 0.0
    %305 = vmatpush1.msra.mxu0 0.0
    %306 = vmatprep.subr.mxu0 0.0
    %307 = vmatpush1.msra.mxu0 0.0
    %308 = vmatprep.subr.mxu0 0.0
    %309 = vmatpush1.msra.mxu0 0.0
    %310 = vmatprep.subr.mxu0 0.0
    %311 = vmatpush1.msra.mxu0 0.0
    %312 = vmatprep.subr.mxu0 0.0
    %313 = vmatpush1.msra.mxu0 0.0
    %314 = vmatprep.subr.mxu0 0.0
    %315 = vmatpush1.msra.mxu0 0.0
    %316 = vmatprep.subr.mxu0 0.0
    %317 = vmatpush1.msra.mxu0 0.0
    %318 = vmatprep.subr.mxu0 0.0
    %319 = vmatpush1.msra.mxu0 0.0
    %320 = vmatprep.subr.mxu0 0.0
    %321 = vmatpush1.msra.mxu0 0.0
    %322 = vmatprep.subr.mxu0 0.0
    %323 = vmatpush1.msra.mxu0 0.0
    %324 = vmatprep.mubr.f32.mxu0 0.0
    %325 = vmatmul.mubr.f32.gmra.mrb[0].mxu0 %v258
    %v326 = vpop.f32.mrb[0].mxu0
    %v327 = vadd.f32 %v255, %v326
    %v328 = vpop.f32.mrb[0].mxu0
    %329 = vdwg.mxu0
    %v330 = vtanh.pop %v327
    %v331 = vld [vmem:[%s8] sm:$0xff]
    %v332 = vld [vmem:[%s8 + $0x8] sm:$0xff]
    %v333 = vld [vmem:[%s8 + $0x10] sm:$0xff]
    %v334 = vld [vmem:[%s8 + $0x18] sm:$0xff]
    %v335 = vld [vmem:[%s9] sm:$0xff]
    %v336 = vld [vmem:[%s9 + $0x8] sm:$0xff]
    %v338 = vsel %vm84, %v158, 0
    %340 = vmatprep.subr.mxu0 0.0
    %341 = vmatpush1.msra.mxu0 %v335
    %342 = vmatprep.subr.mxu0 0.0
    %343 = vmatpush1.msra.mxu0 %v336
    %344 = vmatprep.subr.mxu0 0.0
    %345 = vmatpush1.msra.mxu0 0.0
    %346 = vmatprep.subr.mxu0 0.0
    %347 = vmatpush1.msra.mxu0 0.0
    %348 = vmatprep.subr.mxu0 0.0
    %349 = vmatpush1.msra.mxu0 0.0
    %350 = vmatprep.subr.mxu0 0.0
    %351 = vmatpush1.msra.mxu0 0.0
    %352 = vmatprep.subr.mxu0 0.0
    %353 = vmatpush1.msra.mxu0 0.0
    %354 = vmatprep.subr.mxu0 0.0
    %355 = vmatpush1.msra.mxu0 0.0
    %356 = vmatprep.subr.mxu0 0.0
    %357 = vmatpush1.msra.mxu0 0.0
    %358 = vmatprep.subr.mxu0 0.0
    %359 = vmatpush1.msra.mxu0 0.0
    %360 = vmatprep.subr.mxu0 0.0
    %361 = vmatpush1.msra.mxu0 0.0
    %362 = vmatprep.subr.mxu0 0.0
    %363 = vmatpush1.msra.mxu0 0.0
    %364 = vmatprep.subr.mxu0 0.0
    %365 = vmatpush1.msra.mxu0 0.0
    %366 = vmatprep.subr.mxu0 0.0
    %367 = vmatpush1.msra.mxu0 0.0
    %368 = vmatprep.subr.mxu0 0.0
    %369 = vmatpush1.msra.mxu0 0.0
    %370 = vmatprep.subr.mxu0 0.0
    %371 = vmatpush1.msra.mxu0 0.0
    %372 = vmatprep.subr.mxu0 0.0
    %373 = vmatpush1.msra.mxu0 0.0
    %374 = vmatprep.subr.mxu0 0.0
    %375 = vmatpush1.msra.mxu0 0.0
    %376 = vmatprep.subr.mxu0 0.0
    %377 = vmatpush1.msra.mxu0 0.0
    %378 = vmatprep.subr.mxu0 0.0
    %379 = vmatpush1.msra.mxu0 0.0
    %380 = vmatprep.subr.mxu0 0.0
    %381 = vmatpush1.msra.mxu0 0.0
    %382 = vmatprep.subr.mxu0 0.0
    %383 = vmatpush1.msra.mxu0 0.0
    %384 = vmatprep.subr.mxu0 0.0
    %385 = vmatpush1.msra.mxu0 0.0
    %386 = vmatprep.subr.mxu0 0.0
    %387 = vmatpush1.msra.mxu0 0.0
    %388 = vmatprep.subr.mxu0 0.0
    %389 = vmatpush1.msra.mxu0 0.0
    %390 = vmatprep.subr.mxu0 0.0
    %391 = vmatpush1.msra.mxu0 0.0
    %392 = vmatprep.subr.mxu0 0.0
    %393 = vmatpush1.msra.mxu0 0.0
    %394 = vmatprep.subr.mxu0 0.0
    %395 = vmatpush1.msra.mxu0 0.0
    %396 = vmatprep.subr.mxu0 0.0
    %397 = vmatpush1.msra.mxu0 0.0
    %398 = vmatprep.subr.mxu0 0.0
    %399 = vmatpush1.msra.mxu0 0.0
    %400 = vmatprep.subr.mxu0 0.0
    %401 = vmatpush1.msra.mxu0 0.0
    %402 = vmatprep.subr.mxu0 0.0
    %403 = vmatpush1.msra.mxu0 0.0
    %404 = vmatprep.mubr.f32.mxu0 0.0
    %405 = vmatmul.mubr.f32.gmra.mrb[0].mxu0 %v338
    %v406 = vpop.f32.mrb[0].mxu0
    %v407 = vadd.f32 0.0, %v406
    %v408 = vpop.f32.mrb[0].mxu0
    %409 = vdwg.mxu0
    %v411 = vsel %vm171, %v330, 0
    %413 = vmatprep.subr.mxu0 0.0
    %414 = vmatpush1.msra.mxu0 %v331
    %415 = vmatprep.subr.mxu0 0.0
    %416 = vmatpush1.msra.mxu0 %v332
    %417 = vmatprep.subr.mxu0 0.0
    %418 = vmatpush1.msra.mxu0 %v333
    %419 = vmatprep.subr.mxu0 0.0
    %420 = vmatpush1.msra.mxu0 %v334
    %421 = vmatprep.subr.mxu0 0.0
    %422 = vmatpush1.msra.mxu0 0.0
    %423 = vmatprep.subr.mxu0 0.0
    %424 = vmatpush1.msra.mxu0 0.0
    %425 = vmatprep.subr.mxu0 0.0
    %426 = vmatpush1.msra.mxu0 0.0
    %427 = vmatprep.subr.mxu0 0.0
    %428 = vmatpush1.msra.mxu0 0.0
    %429 = vmatprep.subr.mxu0 0.0
    %430 = vmatpush1.msra.mxu0 0.0
    %431 = vmatprep.subr.mxu0 0.0
    %432 = vmatpush1.msra.mxu0 0.0
    %433 = vmatprep.subr.mxu0 0.0
    %434 = vmatpush1.msra.mxu0 0.0
    %435 = vmatprep.subr.mxu0 0.0
    %436 = vmatpush1.msra.mxu0 0.0
    %437 = vmatprep.subr.mxu0 0.0
    %438 = vmatpush1.msra.mxu0 0.0
    %439 = vmatprep.subr.mxu0 0.0
    %440 = vmatpush1.msra.mxu0 0.0
    %441 = vmatprep.subr.mxu0 0.0
    %442 = vmatpush1.msra.mxu0 0.0
    %443 = vmatprep.subr.mxu0 0.0
    %444 = vmatpush1.msra.mxu0 0.0
    %445 = vmatprep.subr.mxu0 0.0
    %446 = vmatpush1.msra.mxu0 0.0
    %447 = vmatprep.subr.mxu0 0.0
    %448 = vmatpush1.msra.mxu0 0.0
    %449 = vmatprep.subr.mxu0 0.0
    %450 = vmatpush1.msra.mxu0 0.0
    %451 = vmatprep.subr.mxu0 0.0
    %452 = vmatpush1.msra.mxu0 0.0
    %453 = vmatprep.subr.mxu0 0.0
    %454 = vmatpush1.msra.mxu0 0.0
    %455 = vmatprep.subr.mxu0 0.0
    %456 = vmatpush1.msra.mxu0 0.0
    %457 = vmatprep.subr.mxu0 0.0
    %458 = vmatpush1.msra.mxu0 0.0
    %459 = vmatprep.subr.mxu0 0.0
    %460 = vmatpush1.msra.mxu0 0.0
    %461 = vmatprep.subr.mxu0 0.0
    %462 = vmatpush1.msra.mxu0 0.0
    %463 = vmatprep.subr.mxu0 0.0
    %464 = vmatpush1.msra.mxu0 0.0
    %465 = vmatprep.subr.mxu0 0.0
    %466 = vmatpush1.msra.mxu0 0.0
    %467 = vmatprep.subr.mxu0 0.0
    %468 = vmatpush1.msra.mxu0 0.0
    %469 = vmatprep.subr.mxu0 0.0
    %470 = vmatpush1.msra.mxu0 0.0
    %471 = vmatprep.subr.mxu0 0.0
    %472 = vmatpush1.msra.mxu0 0.0
    %473 = vmatprep.subr.mxu0 0.0
    %474 = vmatpush1.msra.mxu0 0.0
    %475 = vmatprep.subr.mxu0 0.0
    %476 = vmatpush1.msra.mxu0 0.0
    %477 = vmatprep.mubr.f32.mxu0 0.0
    %478 = vmatmul.mubr.f32.gmra.mrb[0].mxu0 %v411
    %v479 = vpop.f32.mrb[0].mxu0
    %v480 = vadd.f32 %v407, %v479
    %v481 = vpop.f32.mrb[0].mxu0
    %482 = vdwg.mxu0
    %v483 = vld [vmem:[%s10] sm:$0x1]
    %v485 = vlaneseq
    %v486 = vshrl.u32 %v485, 7
    %v487 = vsub.s32 0, %v486
    %v488 = vrot.slane %v483, %v487
    %v490 = vadd.f32 %v480, %v488
    %vm491 = vcmask 60416
    %v492 = vsel %vm491, %v490, -inf
    %493 = vmax.xlane.f32.xlu0 %v492
    %v494 = vpop.xlane.xlu0 %493
    %v495 = vsub.f32 %v490, %v494
    %v496 = vmul.f32 %v495, 1.442695
    %v497 = vpow.pop %v496
    %v498 = vsel %vm491, %v497, 0.0
    %499 = vadd.xlane.f32.xlu0 %v498
    %v500 = vpop.xlane.xlu0 %499
    %v501 = vrcp.pop %v500
    %v502 = vmul.f32 %v497, %v501
    %503 = vst.msk [vmem:[#allocation8] sm:$0xf] %vm491, %v502
    // Predicated region
    $region58: #{tpu_custom_call.1} parent=1 // pred_check
      _
    $region59: #{tpu_custom_call.1} parent=1 // pred_check_branch
      %505 = sbr.rel (0) target = $region61
    $region60: #{tpu_custom_call.1} parent=1 // pred_region
      %s507 = ssub.s32 64, 64
      %508 = vsyncadd [#allocation4], %s507
      %s510 = sshll.u32 [#allocation8], 4
      %s511 = int_to_ptr.vmem [resolvable:$true] %s510
      %513 = dma.vmem_to_hbm [thread:$0]  %s511, 64, %s11, [#allocation4]
    $region61: #{tpu_custom_call.1} parent=1 // pred_fallthru
      _
    // Predicated region
    $region62: #{tpu_custom_call.1} parent=1 // pred_check
      _
    $region63: #{tpu_custom_call.1} parent=1 // pred_check_branch
      %515 = sbr.rel (0) target = $region65
    $region64: #{tpu_custom_call.1} parent=1 // pred_region
      %516 = dma.done [#allocation4], 64
    $region65: #{tpu_custom_call.1} parent=1 // pred_fallthru
      _
    %517 = vsyncpa [#allocation3], 1
    %518 = vsyncpa [#allocation6], 1
    %519 = vsyncpa [#allocation4], 1

</llo_original>
